<compile_context>
chip_gen: v5e
topology: v5e:2x2
jax: 0.10.0
libtpu: 0.0.40
codegen_flags: <defaults>
</compile_context>

<pallas_src>
import numpy as np
import jax
import jax.numpy as jnp
from jax.experimental import pallas as pl
from jax.experimental.pallas import tpu as pltpu

# ---------------- configuration (SplitParallelQCNN defaults) ----------------
N_QUBITS = 16
N_SPLITS = 4
QPS = N_QUBITS // N_SPLITS          # qubits per split = 4
N_LAYERS = 2
NUM_CLASSES = 5
DIM = 2 ** QPS                      # per-split state dimension = 16
FEATURE_DIM = N_SPLITS * QPS        # 16 quantum features per sample
REQUIRED = N_SPLITS * DIM           # 64 amplitudes consumed per sample
CAT = 2 * REQUIRED                  # 128: fused re|im width
H1, H2 = 128, 64                    # aggregation MLP hidden sizes
OUT_PAD = 128                       # lane-dense padded output width


# -------- quantum circuit -> dense unitary (parameter setup, plain numpy) ----
def _rx(t):
    c, s = np.cos(t / 2.0), np.sin(t / 2.0)
    return np.array([[c, -1j * s], [-1j * s, c]], dtype=np.complex128)


def _ry(t):
    c, s = np.cos(t / 2.0), np.sin(t / 2.0)
    return np.array([[c, -s], [s, c]], dtype=np.complex128)


def _rz(t):
    return np.array([[np.exp(-1j * t / 2.0), 0.0],
                     [0.0, np.exp(1j * t / 2.0)]], dtype=np.complex128)


def _embed_single(g, wire, n):
    # PennyLane convention: wire 0 is the most-significant qubit.
    ops = [np.eye(2, dtype=np.complex128)] * n
    ops[wire] = g
    full = ops[0]
    for o in ops[1:]:
        full = np.kron(full, o)
    return full


def _cnot_full(ctrl, tgt, n):
    dim = 2 ** n
    m = np.zeros((dim, dim), dtype=np.complex128)
    for i in range(dim):
        j = i ^ (1 << (n - 1 - tgt)) if (i >> (n - 1 - ctrl)) & 1 else i
        m[j, i] = 1.0
    return m


def build_unitaries(split_weights_np):
    """split_weights_np: (N_SPLITS, N_LAYERS, QPS, 3) -> (re, im) each (N_SPLITS, DIM, DIM)."""
    u_re = np.zeros((N_SPLITS, DIM, DIM), np.float64)
    u_im = np.zeros((N_SPLITS, DIM, DIM), np.float64)
    for s in range(N_SPLITS):
        u = np.eye(DIM, dtype=np.complex128)
        w = split_weights_np[s]
        for layer in range(N_LAYERS):
            for q in range(QPS):
                g = _rz(w[layer, q, 2]) @ _ry(w[layer, q, 1]) @ _rx(w[layer, q, 0])
                u = _embed_single(g, q, QPS) @ u
            for q in range(QPS):
                u = _cnot_full(q, (q + 1) % QPS, QPS) @ u
        u_re[s] = u.real
        u_im[s] = u.imag
    return u_re, u_im


def z_sign_matrix():
    """(DIM, QPS): column j = PauliZ eigenvalue of basis state i on wire j (MSB order)."""
    z = np.zeros((DIM, QPS), np.float64)
    for i in range(DIM):
        for j in range(QPS):
            z[i, j] = 1.0 - 2.0 * ((i >> (QPS - 1 - j)) & 1)
    return z


# ------------------------------- Pallas kernel -------------------------------
def qcnn_kernel(x_ref, ones_ref, ucat_ref, w1s_ref, b1_ref, w2_ref, b2_ref,
                w3p_ref, b3p_ref, out_ref):
    # x_ref: (TB, 64) bf16 tile of the row-major-flattened NCHW input
    # (truncated / zero-padded to 64 amplitudes in the wrapper).
    x_bf = x_ref[...]                                           # (TB, 64) bf16

    # Fused complex state evolution for all 4 splits, re|im concatenated:
    #   psi[:, :64] = Re(x @ blockdiag(U^T)),  psi[:, 64:] = Im(...)
    # Normalization commutes with the unitary, so raw x feeds the MXU directly.
    psi = jnp.dot(x_bf, ucat_ref[...], preferred_element_type=jnp.float32)
    squared = psi * psi                                         # (TB, 128) f32

    # Per-chunk squared norms of the raw input, broadcast to all 128 psi lanes
    # via one bf16 matmul (ones matrix is exact in bf16); independent of the
    # unitary matmul above so both MXU pushes overlap.  We scale squared
    # amplitudes, hence reciprocal (not rsqrt); EUP approx reciprocal is free.
    xf = x_bf.astype(jnp.float32)
    sq = (xf * xf).astype(jnp.bfloat16)                         # (TB, 64) bf16
    nrm2 = jnp.dot(sq, ones_ref[...], preferred_element_type=jnp.float32)  # (TB,128)
    inv = jnp.where(nrm2 > 0.0, pl.reciprocal(nrm2, approx=True), 1.0)

    # Normalized |<i|psi>|^2, still stacked re^2|im^2.  The PauliZ reduction and
    # the re^2 + im^2 sum are folded into the stacked first-layer weight
    # W1s = vstack([blockdiag(Z) @ W1, blockdiag(Z) @ W1]).
    probs2 = (squared * inv).astype(jnp.bfloat16)               # (TB, 128) bf16

    # Aggregation MLP (Dropout is identity in eval mode).
    # TODO(synk): training-mode stochastic Dropout(0.3) not implemented.
    h1 = jnp.maximum(
        jnp.dot(probs2, w1s_ref[...], preferred_element_type=jnp.float32)
        + b1_ref[...], 0.0)
    h2 = jnp.maximum(
        jnp.dot(h1.astype(jnp.bfloat16), w2_ref[...],
                preferred_element_type=jnp.float32) + b2_ref[...], 0.0)
    logits = jnp.dot(h2.astype(jnp.bfloat16), w3p_ref[...],
                     preferred_element_type=jnp.float32) + b3p_ref[...]
    # lane-dense (TB, 128) bf16 store; real logits live in the first 5 lanes
    out_ref[...] = logits.astype(out_ref.dtype)


# ------------------------------- parameters ---------------------------------
def init_params(key):
    k = jax.random.split(key, 5)
    # quantum split weights: randn * 0.1, shape (n_layers, qubits_per_split, 3) per split
    split_w = jax.random.normal(k[0], (N_SPLITS, N_LAYERS, QPS, 3), jnp.float32) * 0.1
    u_re, u_im = build_unitaries(np.asarray(jax.device_get(split_w), np.float64))

    # fused re|im block-diagonal, pre-transposed unitaries: amp @ [bd(U^T).re | bd(U^T).im]
    u_cat = np.zeros((REQUIRED, CAT), np.float64)
    # per-chunk norm broadcast matrix: column l sums the 16 input lanes of chunk (l % 64)//16
    ones_bcast = np.zeros((REQUIRED, CAT), np.float32)
    for s in range(N_SPLITS):
        rows = slice(s * DIM, (s + 1) * DIM)
        u_cat[rows, s * DIM:(s + 1) * DIM] = u_re[s].T
        u_cat[rows, REQUIRED + s * DIM:REQUIRED + (s + 1) * DIM] = u_im[s].T
        ones_bcast[rows, s * DIM:(s + 1) * DIM] = 1.0
        ones_bcast[rows, REQUIRED + s * DIM:REQUIRED + (s + 1) * DIM] = 1.0

    # PauliZ reduction folded into the first MLP layer, then stacked so that
    # [re^2 | im^2] @ W1s == (re^2 + im^2) @ (blockdiag(Z) @ W1).
    z = z_sign_matrix()                                          # (16, 4)
    z_blk = np.zeros((REQUIRED, FEATURE_DIM), np.float64)
    for s in range(N_SPLITS):
        z_blk[s * DIM:(s + 1) * DIM, s * QPS:(s + 1) * QPS] = z

    # aggregation MLP (deterministic synthetic init; stored already transposed)
    w1 = np.asarray(jax.device_get(
        jax.random.normal(k[1], (FEATURE_DIM, H1), jnp.float32) * 0.1), np.float64)
    w2 = np.asarray(jax.device_get(
        jax.random.normal(k[2], (H1, H2), jnp.float32) * 0.1), np.float64)
    w3 = np.asarray(jax.device_get(
        jax.random.normal(k[3], (H2, NUM_CLASSES), jnp.float32) * 0.1), np.float64)

    w1p = z_blk @ w1                                             # (64, 128)
    w1s = np.vstack([w1p, w1p])                                  # (128, 128)
    w3p = np.zeros((H2, OUT_PAD), np.float64)                    # lane-dense pad
    w3p[:, :NUM_CLASSES] = w3

    return dict(
        ones_bcast=jnp.asarray(ones_bcast, jnp.bfloat16),        # exact in bf16
        u_cat=jnp.asarray(u_cat, jnp.bfloat16),
        w1s=jnp.asarray(w1s, jnp.bfloat16),
        b1=jnp.zeros((1, H1), jnp.float32),
        w2=jnp.asarray(w2, jnp.bfloat16),
        b2=jnp.zeros((1, H2), jnp.float32),
        w3p=jnp.asarray(w3p, jnp.bfloat16),
        b3p=jnp.zeros((1, OUT_PAD), jnp.float32),
    )


# -------------------------------- wrapper ------------------------------------
def _round_up(n, m):
    return ((n + m - 1) // m) * m


def splitparallel_qcnn_forward(x, params, block_b=1024):
    b = x.shape[0]
    flat = x.astype(jnp.float32).reshape(b, -1)                  # NCHW row-major flatten
    n = flat.shape[1]
    if n < REQUIRED:
        flat = jnp.pad(flat, ((0, 0), (0, REQUIRED - n)))
    else:
        flat = flat[:, :REQUIRED]

    # batch tiling: TB multiple of 8, big tiles to amortize grid overhead, but
    # at least 2 grid steps when the batch allows so v7x's 2 TensorCores both
    # get work and DMA pipelines against compute.
    tb = min(block_b, _round_up(b, 8))
    if b > 8:
        tb = min(tb, max(8, _round_up((b + 1) // 2, 8)))
    b_pad = _round_up(b, tb)
    if b_pad != b:
        flat = jnp.pad(flat, ((0, b_pad - b), (0, 0)))
    flat = flat.astype(jnp.bfloat16)                             # halve HBM read bytes

    def const_spec(shape):
        # resident weights/constants; never change across grid steps
        return pl.BlockSpec(shape, lambda i: (0, 0))

    grid_spec = pltpu.PrefetchScalarGridSpec(
        num_scalar_prefetch=0,
        grid=(b_pad // tb,),
        in_specs=[
            pl.BlockSpec((tb, REQUIRED), lambda i: (i, 0)),      # x tile
            const_spec((REQUIRED, CAT)),                         # ones_bcast
            const_spec((REQUIRED, CAT)),                         # u_cat (re|im)
            const_spec((CAT, H1)),                               # w1s (stacked)
            const_spec((1, H1)),                                 # b1
            const_spec((H1, H2)),                                # w2
            const_spec((1, H2)),                                 # b2
            const_spec((H2, OUT_PAD)),                           # w3p
            const_spec((1, OUT_PAD)),                            # b3p
        ],
        out_specs=pl.BlockSpec((tb, OUT_PAD), lambda i: (i, 0)),
    )

    out = pl.pallas_call(
        qcnn_kernel,
        out_shape=jax.ShapeDtypeStruct((b_pad, OUT_PAD), jnp.bfloat16),  # bf16 writeback
        grid_spec=grid_spec,
        compiler_params=pltpu.CompilerParams(
            dimension_semantics=("parallel",)),                  # 2x on v7x megacore
    )(flat, params["ones_bcast"], params["u_cat"],
      params["w1s"], params["b1"], params["w2"], params["b2"],
      params["w3p"], params["b3p"])

    # drop pad rows / lanes; return f32 logits like the PyTorch module
    return out[:b, :NUM_CLASSES].astype(jnp.float32)


# --------------------------------- main --------------------------------------
if __name__ == "__main__":
    key = jax.random.PRNGKey(0)
    kx, kp = jax.random.split(key)
    # layout: NCHW input, (B, C, H, W) = (2, 1, 8, 8) -> 64 values per sample,
    # matching n_splits * 2**qubits_per_split exactly (no pad/truncate needed).
    x = jax.random.normal(kx, (2, 1, 8, 8), dtype=jnp.float32)
    params = init_params(kp)

    out = splitparallel_qcnn_forward(x, params)
    out = jax.block_until_ready(out)
    assert out.shape == (2, NUM_CLASSES) and out.dtype == jnp.float32
    print("KERNEL_OK")
</pallas_src>

<mosaic_0001>
module attributes {stable_mosaic.version = 11 : i64} {
  func.func @qcnn_kernel(%arg0: i32, %arg1: memref<8x64xbf16, #tpu.memory_space<vmem>>, %arg2: memref<64x128xbf16, #tpu.memory_space<vmem>>, %arg3: memref<64x128xbf16, #tpu.memory_space<vmem>>, %arg4: memref<128x128xbf16, #tpu.memory_space<vmem>>, %arg5: memref<1x128xf32, #tpu.memory_space<vmem>>, %arg6: memref<128x64xbf16, #tpu.memory_space<vmem>>, %arg7: memref<1x64xf32, #tpu.memory_space<vmem>>, %arg8: memref<64x128xbf16, #tpu.memory_space<vmem>>, %arg9: memref<1x128xf32, #tpu.memory_space<vmem>>, %arg10: memref<8x128xbf16, #tpu.memory_space<vmem>>) attributes {dimension_semantics = [#tpu.dimension_semantics<parallel>], iteration_bounds = array<i64: 1>, scalar_prefetch = 0 : i64, scratch_operands = 0 : i64, tpu.core_type = #tpu.core_type<tc>, window_params = [{transform_indices = @transform_0, window_bounds = array<i64: 8, 64>}, {pipeline_mode = #tpu.pipeline_mode<synchronous>, transform_indices = @transform_1, window_bounds = array<i64: 64, 128>}, {pipeline_mode = #tpu.pipeline_mode<synchronous>, transform_indices = @transform_2, window_bounds = array<i64: 64, 128>}, {pipeline_mode = #tpu.pipeline_mode<synchronous>, transform_indices = @transform_3, window_bounds = array<i64: 128, 128>}, {pipeline_mode = #tpu.pipeline_mode<synchronous>, transform_indices = @transform_4, window_bounds = array<i64: 1, 128>}, {pipeline_mode = #tpu.pipeline_mode<synchronous>, transform_indices = @transform_5, window_bounds = array<i64: 128, 64>}, {pipeline_mode = #tpu.pipeline_mode<synchronous>, transform_indices = @transform_6, window_bounds = array<i64: 1, 64>}, {pipeline_mode = #tpu.pipeline_mode<synchronous>, transform_indices = @transform_7, window_bounds = array<i64: 64, 128>}, {pipeline_mode = #tpu.pipeline_mode<synchronous>, transform_indices = @transform_8, window_bounds = array<i64: 1, 128>}, {transform_indices = @transform_9, window_bounds = array<i64: 8, 128>}]} {
    %c0 = arith.constant 0 : index
    %c0_0 = arith.constant 0 : index
    %0 = vector.load %arg1[%c0, %c0_0] : memref<8x64xbf16, #tpu.memory_space<vmem>>, vector<8x64xbf16>
    %c0_1 = arith.constant 0 : index
    %c0_2 = arith.constant 0 : index
    %1 = vector.load %arg3[%c0_1, %c0_2] : memref<64x128xbf16, #tpu.memory_space<vmem>>, vector<64x128xbf16>
    %cst = arith.constant dense<0.000000e+00> : vector<8x128xf32>
    %2 = tpu.matmul %0, %1, %cst {dimension_numbers = #tpu.dot_dimension_numbers<[1], [0], [0], [1], [0, 0, 1, 1], [], []>} : vector<8x64xbf16>, vector<64x128xbf16>, vector<8x128xf32> -> vector<8x128xf32>
    %3 = arith.mulf %2, %2 : vector<8x128xf32>
    %4 = arith.extf %0 : vector<8x64xbf16> to vector<8x64xf32>
    %5 = arith.mulf %4, %4 : vector<8x64xf32>
    %6 = arith.truncf %5 : vector<8x64xf32> to vector<8x64xbf16>
    %c0_3 = arith.constant 0 : index
    %c0_4 = arith.constant 0 : index
    %7 = vector.load %arg2[%c0_3, %c0_4] : memref<64x128xbf16, #tpu.memory_space<vmem>>, vector<64x128xbf16>
    %cst_5 = arith.constant dense<0.000000e+00> : vector<8x128xf32>
    %8 = tpu.matmul %6, %7, %cst_5 {dimension_numbers = #tpu.dot_dimension_numbers<[1], [0], [0], [1], [0, 0, 1, 1], [], []>} : vector<8x64xbf16>, vector<64x128xbf16>, vector<8x128xf32> -> vector<8x128xf32>
    %cst_6 = arith.constant 0.000000e+00 : f32
    %9 = vector.broadcast %cst_6 : f32 to vector<8x128xf32>
    %10 = arith.cmpf ogt, %8, %9 : vector<8x128xf32>
    %11 = tpu.reciprocal %8 {approx = true} : vector<8x128xf32> -> vector<8x128xf32>
    %cst_7 = arith.constant 1.000000e+00 : f32
    %12 = vector.broadcast %cst_7 : f32 to vector<8x128xf32>
    %13 = arith.select %10, %11, %12 : vector<8x128xi1>, vector<8x128xf32>
    %14 = arith.mulf %3, %13 : vector<8x128xf32>
    %15 = arith.truncf %14 : vector<8x128xf32> to vector<8x128xbf16>
    %c0_8 = arith.constant 0 : index
    %c0_9 = arith.constant 0 : index
    %16 = vector.load %arg4[%c0_8, %c0_9] : memref<128x128xbf16, #tpu.memory_space<vmem>>, vector<128x128xbf16>
    %cst_10 = arith.constant dense<0.000000e+00> : vector<8x128xf32>
    %17 = tpu.matmul %15, %16, %cst_10 {dimension_numbers = #tpu.dot_dimension_numbers<[1], [0], [0], [1], [0, 0, 1, 1], [], []>} : vector<8x128xbf16>, vector<128x128xbf16>, vector<8x128xf32> -> vector<8x128xf32>
    %c0_11 = arith.constant 0 : index
    %c0_12 = arith.constant 0 : index
    %18 = vector.load %arg5[%c0_11, %c0_12] : memref<1x128xf32, #tpu.memory_space<vmem>>, vector<1x128xf32>
    %19 = vector.broadcast %18 : vector<1x128xf32> to vector<8x128xf32>
    %20 = arith.addf %17, %19 : vector<8x128xf32>
    %cst_13 = arith.constant 0.000000e+00 : f32
    %21 = vector.broadcast %cst_13 : f32 to vector<8x128xf32>
    %22 = arith.maximumf %20, %21 : vector<8x128xf32>
    %23 = arith.truncf %22 : vector<8x128xf32> to vector<8x128xbf16>
    %c0_14 = arith.constant 0 : index
    %c0_15 = arith.constant 0 : index
    %24 = vector.load %arg6[%c0_14, %c0_15] : memref<128x64xbf16, #tpu.memory_space<vmem>>, vector<128x64xbf16>
    %cst_16 = arith.constant dense<0.000000e+00> : vector<8x64xf32>
    %25 = tpu.matmul %23, %24, %cst_16 {dimension_numbers = #tpu.dot_dimension_numbers<[1], [0], [0], [1], [0, 0, 1, 1], [], []>} : vector<8x128xbf16>, vector<128x64xbf16>, vector<8x64xf32> -> vector<8x64xf32>
    %c0_17 = arith.constant 0 : index
    %c0_18 = arith.constant 0 : index
    %26 = vector.load %arg7[%c0_17, %c0_18] : memref<1x64xf32, #tpu.memory_space<vmem>>, vector<1x64xf32>
    %27 = vector.broadcast %26 : vector<1x64xf32> to vector<8x64xf32>
    %28 = arith.addf %25, %27 : vector<8x64xf32>
    %cst_19 = arith.constant 0.000000e+00 : f32
    %29 = vector.broadcast %cst_19 : f32 to vector<8x64xf32>
    %30 = arith.maximumf %28, %29 : vector<8x64xf32>
    %31 = arith.truncf %30 : vector<8x64xf32> to vector<8x64xbf16>
    %c0_20 = arith.constant 0 : index
    %c0_21 = arith.constant 0 : index
    %32 = vector.load %arg8[%c0_20, %c0_21] : memref<64x128xbf16, #tpu.memory_space<vmem>>, vector<64x128xbf16>
    %cst_22 = arith.constant dense<0.000000e+00> : vector<8x128xf32>
    %33 = tpu.matmul %31, %32, %cst_22 {dimension_numbers = #tpu.dot_dimension_numbers<[1], [0], [0], [1], [0, 0, 1, 1], [], []>} : vector<8x64xbf16>, vector<64x128xbf16>, vector<8x128xf32> -> vector<8x128xf32>
    %c0_23 = arith.constant 0 : index
    %c0_24 = arith.constant 0 : index
    %34 = vector.load %arg9[%c0_23, %c0_24] : memref<1x128xf32, #tpu.memory_space<vmem>>, vector<1x128xf32>
    %35 = vector.broadcast %34 : vector<1x128xf32> to vector<8x128xf32>
    %36 = arith.addf %33, %35 : vector<8x128xf32>
    %37 = arith.truncf %36 : vector<8x128xf32> to vector<8x128xbf16>
    %c0_25 = arith.constant 0 : index
    %c0_26 = arith.constant 0 : index
    %38 = vector.load %arg10[%c0_25, %c0_26] : memref<8x128xbf16, #tpu.memory_space<vmem>>, vector<8x128xbf16>
    tpu.vector_store %arg10[%c0_25, %c0_26], %37 {strides = array<i32>} : memref<8x128xbf16, #tpu.memory_space<vmem>>, vector<8x128xbf16>,
    return
  }
  func.func @transform_0(%arg0: i32) -> (i32, i32) {
    %c0_i32 = arith.constant 0 : i32
    %c0_i32_0 = arith.constant 0 : i32
    return %arg0, %c0_i32 : i32, i32
  }
  func.func @transform_1(%arg0: i32) -> (i32, i32) {
    %c0_i32 = arith.constant 0 : i32
    %c0_i32_0 = arith.constant 0 : i32
    %c0_i32_1 = arith.constant 0 : i32
    return %c0_i32, %c0_i32_0 : i32, i32
  }
  func.func @transform_2(%arg0: i32) -> (i32, i32) {
    %c0_i32 = arith.constant 0 : i32
    %c0_i32_0 = arith.constant 0 : i32
    %c0_i32_1 = arith.constant 0 : i32
    return %c0_i32, %c0_i32_0 : i32, i32
  }
  func.func @transform_3(%arg0: i32) -> (i32, i32) {
    %c0_i32 = arith.constant 0 : i32
    %c0_i32_0 = arith.constant 0 : i32
    %c0_i32_1 = arith.constant 0 : i32
    return %c0_i32, %c0_i32_0 : i32, i32
  }
  func.func @transform_4(%arg0: i32) -> (i32, i32) {
    %c0_i32 = arith.constant 0 : i32
    %c0_i32_0 = arith.constant 0 : i32
    %c0_i32_1 = arith.constant 0 : i32
    return %c0_i32, %c0_i32_0 : i32, i32
  }
  func.func @transform_5(%arg0: i32) -> (i32, i32) {
    %c0_i32 = arith.constant 0 : i32
    %c0_i32_0 = arith.constant 0 : i32
    %c0_i32_1 = arith.constant 0 : i32
    return %c0_i32, %c0_i32_0 : i32, i32
  }
  func.func @transform_6(%arg0: i32) -> (i32, i32) {
    %c0_i32 = arith.constant 0 : i32
    %c0_i32_0 = arith.constant 0 : i32
    %c0_i32_1 = arith.constant 0 : i32
    return %c0_i32, %c0_i32_0 : i32, i32
  }
  func.func @transform_7(%arg0: i32) -> (i32, i32) {
    %c0_i32 = arith.constant 0 : i32
    %c0_i32_0 = arith.constant 0 : i32
    %c0_i32_1 = arith.constant 0 : i32
    return %c0_i32, %c0_i32_0 : i32, i32
  }
  func.func @transform_8(%arg0: i32) -> (i32, i32) {
    %c0_i32 = arith.constant 0 : i32
    %c0_i32_0 = arith.constant 0 : i32
    %c0_i32_1 = arith.constant 0 : i32
    return %c0_i32, %c0_i32_0 : i32, i32
  }
  func.func @transform_9(%arg0: i32) -> (i32, i32) {
    %c0_i32 = arith.constant 0 : i32
    %c0_i32_0 = arith.constant 0 : i32
    return %arg0, %c0_i32 : i32, i32
  }
}

</mosaic_0001>

<llo_original>
// kernel: tpu_custom_call.1
$region0: #{tpu_custom_call.1}
  #allocation0 [shape = 'u32[]', space=smem, size = 0x4, offset = 0x4, fixed_abs, tag = 'smem constant byte address 0x4 - core index']
  #allocation1 [shape = 'u32[72,128]{1,0:T(1,128)}', space=vmem, size = 0x9000, scoped, tag = 'internal scratch']
  %s0 = inlined_call_operand.hbm [shape: bf16[8,64], index: 0, kind: input, shape index: {}]
  %s1 = inlined_call_operand.vmem [shape: bf16[64,128], index: 1, kind: input, shape index: {}]
  %s2 = inlined_call_operand.hbm [shape: bf16[64,128], index: 2, kind: input, shape index: {}]
  %s3 = inlined_call_operand.vmem [shape: bf16[128,128], index: 3, kind: input, shape index: {}]
  %s4 = inlined_call_operand.vmem [shape: f32[1,128], index: 4, kind: input, shape index: {}]
  %s5 = inlined_call_operand.vmem [shape: bf16[128,64], index: 5, kind: input, shape index: {}]
  %s6 = inlined_call_operand.vmem [shape: f32[1,64], index: 6, kind: input, shape index: {}]
  %s7 = inlined_call_operand.hbm [shape: bf16[64,128], index: 7, kind: input, shape index: {}]
  %s8 = inlined_call_operand.vmem [shape: f32[1,128], index: 8, kind: input, shape index: {}]
  %s9 = inlined_call_operand.hbm [shape: bf16[8,128], index: 9, kind: output, shape index: {}]
  %s10 = sld [smem:[#allocation0]]
  $region58: #{tpu_custom_call.1} parent=0
    _
  %s12 = ssub.s32 1, %s10
  %s13 = scalar_select 0, %s12, %s10
  $region1: #{tpu_custom_call.1} parent=0
    #allocation2 [shape = 'u8[2048]{0}', space=vmem, size = 0x800, scoped, tag = 'input window, operand 0, single buffered']
    #allocation3 [shape = 's32[1]{0}', space=sflag, size = 0x4, scoped, tag = 'scoped memory for tpu_custom_call.1']
    #allocation4 [shape = 's32[1]{0}', space=sflag, size = 0x4, scoped, tag = 'scoped memory for tpu_custom_call.1']
    #allocation5 [shape = 'u8[16384]{0}', space=vmem, size = 0x4000, scoped, tag = 'input window, operand 2, single buffered']
    #allocation6 [shape = 's32[1]{0}', space=sflag, size = 0x4, scoped, tag = 'scoped memory for tpu_custom_call.1']
    #allocation7 [shape = 'u8[16384]{0}', space=vmem, size = 0x4000, scoped, tag = 'input window, operand 7, single buffered']
    #allocation8 [shape = 'u8[2048]{0}', space=vmem, size = 0x800, scoped, tag = 'output window, operand 0, single buffered']
    %14 = vsyncpa [#allocation3], 0
    %15 = vsyncpa [#allocation6], 0
    %16 = vsyncpa [#allocation4], 0
    // Predicated region
    $region2: #{tpu_custom_call.1} parent=1 // pred_check
      _
    $region3: #{tpu_custom_call.1} parent=1 // pred_check_branch
      %18 = sbr.rel (0) target = $region5
    $region4: #{tpu_custom_call.1} parent=1 // pred_region
      %20 = vsyncadd [#allocation3], 0
      %s22 = sshll.u32 %s0, 4
      %s23 = int_to_ptr.hbm [resolvable:$true] %s22
      %s24 = sshll.u32 [#allocation2], 4
      %s25 = int_to_ptr.vmem [resolvable:$true] %s24
      %27 = dma.hbm_to_vmem [thread:$0]  %s23, 64, %s25, [#allocation3]
    $region5: #{tpu_custom_call.1} parent=1 // pred_fallthru
      _
    // Predicated region
    $region6: #{tpu_custom_call.1} parent=1 // pred_check
      _
    $region7: #{tpu_custom_call.1} parent=1 // pred_check_branch
      %29 = sbr.rel (0) target = $region9
    $region8: #{tpu_custom_call.1} parent=1 // pred_region
      _
    $region9: #{tpu_custom_call.1} parent=1 // pred_fallthru
      _
    // Predicated region
    $region10: #{tpu_custom_call.1} parent=1 // pred_check
      _
    $region11: #{tpu_custom_call.1} parent=1 // pred_check_branch
      %31 = sbr.rel (0) target = $region13
    $region12: #{tpu_custom_call.1} parent=1 // pred_region
      %33 = vsyncadd [#allocation6], 0
      %s34 = sshll.u32 %s2, 4
      %s35 = int_to_ptr.hbm [resolvable:$true] %s34
      %s36 = sshll.u32 [#allocation5], 4
      %s37 = int_to_ptr.vmem [resolvable:$true] %s36
      %42 = dma.hbm_to_vmem [thread:$0]  %s35, 512, %s37, [#allocation6], 64, 64, 4
    $region13: #{tpu_custom_call.1} parent=1 // pred_fallthru
      _
    // Predicated region
    $region14: #{tpu_custom_call.1} parent=1 // pred_check
      _
    $region15: #{tpu_custom_call.1} parent=1 // pred_check_branch
      %44 = sbr.rel (0) target = $region17
    $region16: #{tpu_custom_call.1} parent=1 // pred_region
      _
    $region17: #{tpu_custom_call.1} parent=1 // pred_fallthru
      _
    // Predicated region
    $region18: #{tpu_custom_call.1} parent=1 // pred_check
      _
    $region19: #{tpu_custom_call.1} parent=1 // pred_check_branch
      %46 = sbr.rel (0) target = $region21
    $region20: #{tpu_custom_call.1} parent=1 // pred_region
      _
    $region21: #{tpu_custom_call.1} parent=1 // pred_fallthru
      _
    // Predicated region
    $region22: #{tpu_custom_call.1} parent=1 // pred_check
      _
    $region23: #{tpu_custom_call.1} parent=1 // pred_check_branch
      %48 = sbr.rel (0) target = $region25
    $region24: #{tpu_custom_call.1} parent=1 // pred_region
      _
    $region25: #{tpu_custom_call.1} parent=1 // pred_fallthru
      _
    // Predicated region
    $region26: #{tpu_custom_call.1} parent=1 // pred_check
      _
    $region27: #{tpu_custom_call.1} parent=1 // pred_check_branch
      %50 = sbr.rel (0) target = $region29
    $region28: #{tpu_custom_call.1} parent=1 // pred_region
      _
    $region29: #{tpu_custom_call.1} parent=1 // pred_fallthru
      _
    // Predicated region
    $region30: #{tpu_custom_call.1} parent=1 // pred_check
      _
    $region31: #{tpu_custom_call.1} parent=1 // pred_check_branch
      %52 = sbr.rel (0) target = $region33
    $region32: #{tpu_custom_call.1} parent=1 // pred_region
      %54 = vsyncadd [#allocation6], 0
      %s55 = sshll.u32 %s7, 4
      %s56 = int_to_ptr.hbm [resolvable:$true] %s55
      %s57 = sshll.u32 [#allocation7], 4
      %s58 = int_to_ptr.vmem [resolvable:$true] %s57
      %63 = dma.hbm_to_vmem [thread:$0]  %s56, 512, %s58, [#allocation6], 64, 64, 4
    $region33: #{tpu_custom_call.1} parent=1 // pred_fallthru
      _
    // Predicated region
    $region34: #{tpu_custom_call.1} parent=1 // pred_check
      _
    $region35: #{tpu_custom_call.1} parent=1 // pred_check_branch
      %65 = sbr.rel (0) target = $region37
    $region36: #{tpu_custom_call.1} parent=1 // pred_region
      _
    $region37: #{tpu_custom_call.1} parent=1 // pred_fallthru
      _
    // Predicated region
    $region38: #{tpu_custom_call.1} parent=1 // pred_check
      _
    $region39: #{tpu_custom_call.1} parent=1 // pred_check_branch
      %67 = sbr.rel (0) target = $region41
    $region40: #{tpu_custom_call.1} parent=1 // pred_region
      %69 = dma.done [#allocation3], 64
    $region41: #{tpu_custom_call.1} parent=1 // pred_fallthru
      _
    // Predicated region
    $region42: #{tpu_custom_call.1} parent=1 // pred_check
      _
    $region43: #{tpu_custom_call.1} parent=1 // pred_check_branch
      %71 = sbr.rel (0) target = $region45
    $region44: #{tpu_custom_call.1} parent=1 // pred_region
      %73 = dma.done [#allocation6], 512
    $region45: #{tpu_custom_call.1} parent=1 // pred_fallthru
      _
    // Predicated region
    $region46: #{tpu_custom_call.1} parent=1 // pred_check
      _
    $region47: #{tpu_custom_call.1} parent=1 // pred_check_branch
      %75 = sbr.rel (0) target = $region49
    $region48: #{tpu_custom_call.1} parent=1 // pred_region
      %77 = dma.done [#allocation6], 512
    $region49: #{tpu_custom_call.1} parent=1 // pred_fallthru
      _
    %v79 = vld [vmem:[#allocation2] sm:$0xf]
    %v80 = vld [vmem:[#allocation5] sm:$0xf]
    %v81 = vld [vmem:[#allocation5 + $0x4] sm:$0xf]
    %v82 = vld [vmem:[#allocation5 + $0x8] sm:$0xf]
    %v83 = vld [vmem:[#allocation5 + $0xc] sm:$0xf]
    %v84 = vld [vmem:[#allocation5 + $0x10] sm:$0xf]
    %v85 = vld [vmem:[#allocation5 + $0x14] sm:$0xf]
    %v86 = vld [vmem:[#allocation5 + $0x18] sm:$0xf]
    %v87 = vld [vmem:[#allocation5 + $0x1c] sm:$0xf]
    %v96 = vunpack.c.l.b16 %v80
    %v97 = vunpack.c.l.b16 %v81
    %v98 = vunpack.c.l.b16 %v82
    %v99 = vunpack.c.l.b16 %v83
    %v100 = vunpack.c.l.b16 %v84
    %v101 = vunpack.c.l.b16 %v85
    %v102 = vunpack.c.l.b16 %v86
    %v103 = vunpack.c.l.b16 %v87
    %v104 = vpack.c.b16 %v97, %v96
    %v105 = vpack.c.b16 %v99, %v98
    %v106 = vpack.c.b16 %v101, %v100
    %v107 = vpack.c.b16 %v103, %v102
    %vm112 = vcmask 523264
    %v114 = vsel %vm112, %v79, 0
    %116 = vmatpush.bf16.msra.mxu0 0
    %117 = vmatpush.bf16.msra.mxu0 0
    %118 = vmatpush.bf16.msra.mxu0 0
    %119 = vmatpush.bf16.msra.mxu0 0
    %120 = vmatpush.bf16.msra.mxu0 %v107
    %121 = vmatpush.bf16.msra.mxu0 %v106
    %122 = vmatpush.bf16.msra.mxu0 %v105
    %123 = vmatpush.bf16.msra.mxu0 %v104
    %124 = vmatmul.bf16.gmra.mxu0 %v114
    %v125 = vpop.f32.mrf.mxu0
    %v126 = vadd.f32 0.0, %v125
    %v127 = vpop.f32.mrf.mxu0
    %128 = vdwg.mxu0
    %v129 = vmul.f32 %v126, %v126
    %v130 = vunpack.c.l.bf16 %v79
    %v131 = vmul.f32 %v130, %v130
    %v132 = vpack.c.bf16 %v131, %v131
    %v133 = vld [vmem:[%s1] sm:$0xf]
    %v134 = vld [vmem:[%s1 + $0x4] sm:$0xf]
    %v135 = vld [vmem:[%s1 + $0x8] sm:$0xf]
    %v136 = vld [vmem:[%s1 + $0xc] sm:$0xf]
    %v137 = vld [vmem:[%s1 + $0x10] sm:$0xf]
    %v138 = vld [vmem:[%s1 + $0x14] sm:$0xf]
    %v139 = vld [vmem:[%s1 + $0x18] sm:$0xf]
    %v140 = vld [vmem:[%s1 + $0x1c] sm:$0xf]
    %v149 = vunpack.c.l.b16 %v133
    %v150 = vunpack.c.l.b16 %v134
    %v151 = vunpack.c.l.b16 %v135
    %v152 = vunpack.c.l.b16 %v136
    %v153 = vunpack.c.l.b16 %v137
    %v154 = vunpack.c.l.b16 %v138
    %v155 = vunpack.c.l.b16 %v139
    %v156 = vunpack.c.l.b16 %v140
    %v157 = vpack.c.b16 %v150, %v149
    %v158 = vpack.c.b16 %v152, %v151
    %v159 = vpack.c.b16 %v154, %v153
    %v160 = vpack.c.b16 %v156, %v155
    %v166 = vsel %vm112, %v132, 0
    %168 = vmatpush.bf16.msra.mxu0 0
    %169 = vmatpush.bf16.msra.mxu0 0
    %170 = vmatpush.bf16.msra.mxu0 0
    %171 = vmatpush.bf16.msra.mxu0 0
    %172 = vmatpush.bf16.msra.mxu0 %v160
    %173 = vmatpush.bf16.msra.mxu0 %v159
    %174 = vmatpush.bf16.msra.mxu0 %v158
    %175 = vmatpush.bf16.msra.mxu0 %v157
    %176 = vmatmul.bf16.gmra.mxu0 %v166
    %v177 = vpop.f32.mrf.mxu0
    %v178 = vadd.f32 0.0, %v177
    %v179 = vpop.f32.mrf.mxu0
    %180 = vdwg.mxu0
    %vm181 = vcmp.gt.f32.partialorder %v178, 0.0
    %v182 = vrcp.pop %v178
    %v183 = vsel %vm181, %v182, 1.0
    %v184 = vmul.f32 %v129, %v183
    %v185 = vpack.c.bf16 %v184, %v184
    %v186 = vld [vmem:[%s3] sm:$0xf]
    %v187 = vld [vmem:[%s3 + $0x4] sm:$0xf]
    %v188 = vld [vmem:[%s3 + $0x8] sm:$0xf]
    %v189 = vld [vmem:[%s3 + $0xc] sm:$0xf]
    %v190 = vld [vmem:[%s3 + $0x10] sm:$0xf]
    %v191 = vld [vmem:[%s3 + $0x14] sm:$0xf]
    %v192 = vld [vmem:[%s3 + $0x18] sm:$0xf]
    %v193 = vld [vmem:[%s3 + $0x1c] sm:$0xf]
    %v194 = vld [vmem:[%s3 + $0x20] sm:$0xf]
    %v195 = vld [vmem:[%s3 + $0x24] sm:$0xf]
    %v196 = vld [vmem:[%s3 + $0x28] sm:$0xf]
    %v197 = vld [vmem:[%s3 + $0x2c] sm:$0xf]
    %v198 = vld [vmem:[%s3 + $0x30] sm:$0xf]
    %v199 = vld [vmem:[%s3 + $0x34] sm:$0xf]
    %v200 = vld [vmem:[%s3 + $0x38] sm:$0xf]
    %v201 = vld [vmem:[%s3 + $0x3c] sm:$0xf]
    %v202 = vld [vmem:[%s4] sm:$0x1]
    %v204 = vperm.slane %v202, 0
    %v222 = vunpack.c.l.b16 %v186
    %v223 = vunpack.c.l.b16 %v187
    %v224 = vunpack.c.l.b16 %v188
    %v225 = vunpack.c.l.b16 %v189
    %v226 = vunpack.c.l.b16 %v190
    %v227 = vunpack.c.l.b16 %v191
    %v228 = vunpack.c.l.b16 %v192
    %v229 = vunpack.c.l.b16 %v193
    %v230 = vunpack.c.l.b16 %v194
    %v231 = vunpack.c.l.b16 %v195
    %v232 = vunpack.c.l.b16 %v196
    %v233 = vunpack.c.l.b16 %v197
    %v234 = vunpack.c.l.b16 %v198
    %v235 = vunpack.c.l.b16 %v199
    %v236 = vunpack.c.l.b16 %v200
    %v237 = vunpack.c.l.b16 %v201
    %v238 = vpack.c.b16 %v223, %v222
    %v239 = vpack.c.b16 %v225, %v224
    %v240 = vpack.c.b16 %v227, %v226
    %v241 = vpack.c.b16 %v229, %v228
    %v242 = vpack.c.b16 %v231, %v230
    %v243 = vpack.c.b16 %v233, %v232
    %v244 = vpack.c.b16 %v235, %v234
    %v245 = vpack.c.b16 %v237, %v236
    %254 = vmatpush.bf16.msra.mxu0 %v245
    %255 = vmatpush.bf16.msra.mxu0 %v244
    %256 = vmatpush.bf16.msra.mxu0 %v243
    %257 = vmatpush.bf16.msra.mxu0 %v242
    %258 = vmatpush.bf16.msra.mxu0 %v241
    %259 = vmatpush.bf16.msra.mxu0 %v240
    %260 = vmatpush.bf16.msra.mxu0 %v239
    %261 = vmatpush.bf16.msra.mxu0 %v238
    %262 = vmatmul.bf16.gmra.mxu0 %v185
    %v263 = vpop.f32.mrf.mxu0
    %v264 = vadd.f32 %v204, %v263
    %v265 = vpop.f32.mrf.mxu0
    %266 = vdwg.mxu0
    %v267 = vmax.f32 %v264, 0.0
    %v268 = vpack.c.bf16 %v267, %v267
    %v269 = vld [vmem:[%s5] sm:$0xf]
    %v270 = vld [vmem:[%s5 + $0x4] sm:$0xf]
    %v271 = vld [vmem:[%s5 + $0x8] sm:$0xf]
    %v272 = vld [vmem:[%s5 + $0xc] sm:$0xf]
    %v273 = vld [vmem:[%s5 + $0x10] sm:$0xf]
    %v274 = vld [vmem:[%s5 + $0x14] sm:$0xf]
    %v275 = vld [vmem:[%s5 + $0x18] sm:$0xf]
    %v276 = vld [vmem:[%s5 + $0x1c] sm:$0xf]
    %v277 = vld [vmem:[%s5 + $0x20] sm:$0xf]
    %v278 = vld [vmem:[%s5 + $0x24] sm:$0xf]
    %v279 = vld [vmem:[%s5 + $0x28] sm:$0xf]
    %v280 = vld [vmem:[%s5 + $0x2c] sm:$0xf]
    %v281 = vld [vmem:[%s5 + $0x30] sm:$0xf]
    %v282 = vld [vmem:[%s5 + $0x34] sm:$0xf]
    %v283 = vld [vmem:[%s5 + $0x38] sm:$0xf]
    %v284 = vld [vmem:[%s5 + $0x3c] sm:$0xf]
    %v285 = vld [vmem:[%s6] sm:$0x1]
    %v287 = vperm.slane %v285, 0
    %v305 = vunpack.c.l.b16 %v269
    %v306 = vunpack.c.l.b16 %v270
    %v307 = vunpack.c.l.b16 %v271
    %v308 = vunpack.c.l.b16 %v272
    %v309 = vunpack.c.l.b16 %v273
    %v310 = vunpack.c.l.b16 %v274
    %v311 = vunpack.c.l.b16 %v275
    %v312 = vunpack.c.l.b16 %v276
    %v313 = vunpack.c.l.b16 %v277
    %v314 = vunpack.c.l.b16 %v278
    %v315 = vunpack.c.l.b16 %v279
    %v316 = vunpack.c.l.b16 %v280
    %v317 = vunpack.c.l.b16 %v281
    %v318 = vunpack.c.l.b16 %v282
    %v319 = vunpack.c.l.b16 %v283
    %v320 = vunpack.c.l.b16 %v284
    %v321 = vpack.c.b16 %v306, %v305
    %v322 = vpack.c.b16 %v308, %v307
    %v323 = vpack.c.b16 %v310, %v309
    %v324 = vpack.c.b16 %v312, %v311
    %v325 = vpack.c.b16 %v314, %v313
    %v326 = vpack.c.b16 %v316, %v315
    %v327 = vpack.c.b16 %v318, %v317
    %v328 = vpack.c.b16 %v320, %v319
    %337 = vmatpush.bf16.msra.mxu0 %v328
    %338 = vmatpush.bf16.msra.mxu0 %v327
    %339 = vmatpush.bf16.msra.mxu0 %v326
    %340 = vmatpush.bf16.msra.mxu0 %v325
    %341 = vmatpush.bf16.msra.mxu0 %v324
    %342 = vmatpush.bf16.msra.mxu0 %v323
    %343 = vmatpush.bf16.msra.mxu0 %v322
    %344 = vmatpush.bf16.msra.mxu0 %v321
    %345 = vmatmul.bf16.gmra.mxu0 %v268
    %v346 = vpop.f32.mrf.mxu0
    %v347 = vadd.f32 %v287, %v346
    %v348 = vpop.f32.mrf.mxu0
    %349 = vdwg.mxu0
    %v350 = vmax.f32 %v347, 0.0
    %v351 = vpack.c.bf16 %v350, %v350
    %v352 = vld [vmem:[#allocation7] sm:$0xf]
    %v353 = vld [vmem:[#allocation7 + $0x4] sm:$0xf]
    %v354 = vld [vmem:[#allocation7 + $0x8] sm:$0xf]
    %v355 = vld [vmem:[#allocation7 + $0xc] sm:$0xf]
    %v356 = vld [vmem:[#allocation7 + $0x10] sm:$0xf]
    %v357 = vld [vmem:[#allocation7 + $0x14] sm:$0xf]
    %v358 = vld [vmem:[#allocation7 + $0x18] sm:$0xf]
    %v359 = vld [vmem:[#allocation7 + $0x1c] sm:$0xf]
    %v360 = vld [vmem:[%s8] sm:$0x1]
    %v362 = vperm.slane %v360, 0
    %v372 = vunpack.c.l.b16 %v352
    %v373 = vunpack.c.l.b16 %v353
    %v374 = vunpack.c.l.b16 %v354
    %v375 = vunpack.c.l.b16 %v355
    %v376 = vunpack.c.l.b16 %v356
    %v377 = vunpack.c.l.b16 %v357
    %v378 = vunpack.c.l.b16 %v358
    %v379 = vunpack.c.l.b16 %v359
    %v380 = vpack.c.b16 %v373, %v372
    %v381 = vpack.c.b16 %v375, %v374
    %v382 = vpack.c.b16 %v377, %v376
    %v383 = vpack.c.b16 %v379, %v378
    %v389 = vsel %vm112, %v351, 0
    %391 = vmatpush.bf16.msra.mxu0 0
    %392 = vmatpush.bf16.msra.mxu0 0
    %393 = vmatpush.bf16.msra.mxu0 0
    %394 = vmatpush.bf16.msra.mxu0 0
    %395 = vmatpush.bf16.msra.mxu0 %v383
    %396 = vmatpush.bf16.msra.mxu0 %v382
    %397 = vmatpush.bf16.msra.mxu0 %v381
    %398 = vmatpush.bf16.msra.mxu0 %v380
    %399 = vmatmul.bf16.gmra.mxu0 %v389
    %v400 = vpop.f32.mrf.mxu0
    %v401 = vadd.f32 %v362, %v400
    %v402 = vpop.f32.mrf.mxu0
    %403 = vdwg.mxu0
    %v404 = vpack.c.bf16 %v401, %v401
    %405 = vst [vmem:[#allocation8] sm:$0xf] %v404
    // Predicated region
    $region50: #{tpu_custom_call.1} parent=1 // pred_check
      _
    $region51: #{tpu_custom_call.1} parent=1 // pred_check_branch
      %407 = sbr.rel (0) target = $region53
    $region52: #{tpu_custom_call.1} parent=1 // pred_region
      %409 = vsyncadd [#allocation4], 0
      %s411 = sshll.u32 [#allocation8], 4
      %s412 = int_to_ptr.vmem [resolvable:$true] %s411
      %s413 = sshll.u32 %s9, 4
      %s414 = int_to_ptr.hbm [resolvable:$true] %s413
      %416 = dma.vmem_to_hbm [thread:$0]  %s412, 64, %s414, [#allocation4]
    $region53: #{tpu_custom_call.1} parent=1 // pred_fallthru
      _
    // Predicated region
    $region54: #{tpu_custom_call.1} parent=1 // pred_check
      _
    $region55: #{tpu_custom_call.1} parent=1 // pred_check_branch
      %418 = sbr.rel (0) target = $region57
    $region56: #{tpu_custom_call.1} parent=1 // pred_region
      %420 = dma.done [#allocation4], 64
    $region57: #{tpu_custom_call.1} parent=1 // pred_fallthru
      _
    %421 = vsyncpa [#allocation3], 1
    %422 = vsyncpa [#allocation6], 1
    %423 = vsyncpa [#allocation4], 1

</llo_original>
